<compile_context>
chip_gen: v5e
topology: v5e:2x2
jax: 0.10.0
libtpu: 0.0.40
codegen_flags: <defaults>
</compile_context>

<pallas_src>
import jax
import jax.numpy as jnp
from jax.experimental import pallas as pl
from jax.experimental.pallas import tpu as pltpu

# "config" constants (synthetic, deterministic)
MAX_PTS_PER_VOXEL = 8   # config['max_pts_per_voxel'] (power of two)
IN_CHANNELS = 8
OUT_CHANNELS = 32       # must be even; units = OUT_CHANNELS // 2
UNITS = OUT_CHANNELS // 2
BN_EPS = 1e-5


def vfe_kernel(x_ref, m_ref, w_ref, b_ref, sel_ref, psel_ref, o_ref):
    """One block of voxels, fully lane-dense.

    x_ref:    (BV, T*C)    voxel-major rows, point*channel in lanes
    m_ref:    (BV, T)      per-point 0/1 mask, float32
    w_ref:    (T*C, T*2U)  block-diagonal [w_eff | w_eff] per point (BN folded)
    b_ref:    (1, T*2U)    matching bias
    sel_ref:  (T, T*2U)    0/1 selector expanding the point mask to output lanes
    psel_ref: (1, T*2U)    1.0 on the "pointwise" half of each 2U lane group
    o_ref:    (BV, T*2U)
    """
    T = m_ref.shape[1]
    two_u = o_ref.shape[1] // T        # 2 * units

    # Linear (+ folded BatchNorm) + ReLU.
    # s[b, t*2U + j] = relu(linear(x[b, t, :]))[j % U]  (duplicated in both halves)
    s = jnp.dot(x_ref[...], w_ref[...], preferred_element_type=jnp.float32)
    s = jnp.maximum(s + b_ref[...], 0.0)

    # Per-voxel max over the T points: rotate-and-max tree with period 2U.
    # After log2(T) rounds every lane l holds max_t s[b, t*2U + (l % 2U)], i.e.
    # the aggregated feature already broadcast to every point's lane slot.
    # Rolls run on the XLU (free slot under the mem-bound regime), no relayout.
    agg = s
    shift = two_u
    while shift < T * two_u:
        agg = jnp.maximum(agg, pltpu.roll(agg, shift, axis=1))
        shift *= 2

    # First U lanes of each 2U group -> pointwise, second U -> aggregated.
    # (This IS the concat, written in place; selector hoisted to a constant.)
    concat = jnp.where(psel_ref[...] > 0.5, s, agg)

    # Expand the (BV, T) point mask to (BV, T*2U) output lanes (exact 0/1 matmul).
    maskv = jnp.dot(m_ref[...], sel_ref[...], preferred_element_type=jnp.float32)

    o_ref[...] = (concat * maskv).astype(o_ref.dtype)


def _expand_params(w_eff, b_eff, T):
    """Build the lane-dense block-diagonal weight/bias and the lane selectors."""
    C, U = w_eff.shape
    w2 = jnp.concatenate([w_eff, w_eff], axis=1)                        # (C, 2U)
    eye = jnp.eye(T, dtype=jnp.float32)
    w_dup = jnp.einsum("ts,cu->tcsu", eye, w2).reshape(T * C, T * 2 * U)
    b_dup = jnp.tile(jnp.concatenate([b_eff, b_eff]), T).reshape(1, T * 2 * U)
    lane = jnp.arange(T * 2 * U)
    msel = ((lane[None, :] // (2 * U)) == jnp.arange(T)[:, None]).astype(jnp.float32)
    psel = ((lane % (2 * U)) < U).astype(jnp.float32).reshape(1, T * 2 * U)
    return w_dup, b_dup, msel, psel


def _round_up(v, m):
    return -(-v // m) * m


def _tpu_topology():
    """Best-effort (tensorcores sharing the grid, scoped VMEM budget in bytes)."""
    num_cores = 1
    vmem_budget = 64 * 1024 * 1024          # single-TC parts have 128 MiB physical
    try:
        kind = jax.devices()[0].device_kind.lower()
    except Exception:  # pragma: no cover - defensive; defaults are safe everywhere
        kind = ""
    if "v7" in kind:
        # v7x: 2 TensorCores, 64 MiB VMEM per core -> stay at the 32 MiB scoped
        # default and split the grid evenly across both cores.
        num_cores = 2
        vmem_budget = 32 * 1024 * 1024
    elif "v4" in kind or "v5p" in kind:
        # megacore parts: "parallel" grid axes shard across 2 cores.
        num_cores = 2
    return num_cores, vmem_budget


def vfe_forward(x, mask, w_eff, b_eff, *, block_voxels=4096, out_dtype=jnp.float32):
    """x: (N, T, C) f32; mask: (N, T, 1) bool/float; returns (N, T, 2*U)."""
    N, T, C = x.shape
    U = w_eff.shape[1]
    two_u = 2 * U
    assert T & (T - 1) == 0, "max_pts_per_voxel must be a power of two"

    # Lane-dense 2-D views (free reshapes at the HBM level).
    x2 = x.reshape(N, T * C).astype(jnp.float32)
    m2 = mask.reshape(N, T).astype(jnp.float32)

    num_cores, vmem_budget = _tpu_topology()
    out_itemsize = jnp.dtype(out_dtype).itemsize

    # VMEM accounting: double-buffered (in + mask + out) per block, plus the
    # resident constants (their index_map is constant so they are DMA'd once,
    # but the default pipeline still reserves 2x their footprint).
    io_bytes_per_voxel = 4 * (T * C + T) + out_itemsize * (T * two_u)
    const_bytes = 4 * ((T * C) * (T * two_u) + (T * two_u)
                       + T * (T * two_u) + (T * two_u))
    headroom = 2 * const_bytes + (4 << 20)
    bv_vmem_cap = max(8, ((vmem_budget - headroom) // (2 * io_bytes_per_voxel)) // 8 * 8)
    bv_cap = max(8, min(int(block_voxels), int(bv_vmem_cap)))

    if num_cores >= 2 and N > 8:
        # Even, balanced grid across the TensorCores; each block <= bv_cap.
        pairs = max(1, int(pl.cdiv(N, 2 * bv_cap)))
        n_blocks = 2 * pairs
        bv = _round_up(int(pl.cdiv(N, n_blocks)), 8)
    else:
        # Single-TC: never force a grid split -- largest block that fits.
        bv = min(bv_cap, _round_up(N, 8))
        n_blocks = int(pl.cdiv(N, bv))

    # Ragged N: zero-padded tail (padded rows have mask == 0, sliced off after).
    n_pad = n_blocks * bv
    if n_pad != N:
        x2 = jnp.pad(x2, ((0, n_pad - N), (0, 0)))
        m2 = jnp.pad(m2, ((0, n_pad - N), (0, 0)))

    w_dup, b_dup, msel, psel = _expand_params(w_eff, b_eff, T)

    # Advisory cost so XLA can overlap this short, mem-bound kernel with the
    # surrounding voxelization pipeline.
    flops = 2 * n_pad * (T * C) * (T * two_u) + 2 * n_pad * T * (T * two_u)
    bytes_accessed = (n_pad * (T * C + T) * 4
                      + n_pad * (T * two_u) * out_itemsize
                      + const_bytes)
    cost = pl.CostEstimate(flops=flops, transcendentals=0,
                           bytes_accessed=bytes_accessed)

    out = pl.pallas_call(
        vfe_kernel,
        out_shape=jax.ShapeDtypeStruct((n_pad, T * two_u), out_dtype),
        grid_spec=pltpu.PrefetchScalarGridSpec(
            num_scalar_prefetch=0,
            grid=(n_blocks,),
            in_specs=[
                pl.BlockSpec((bv, T * C), lambda i: (i, 0)),          # x
                pl.BlockSpec((bv, T), lambda i: (i, 0)),              # mask
                pl.BlockSpec((T * C, T * two_u), lambda i: (0, 0)),   # w_dup
                pl.BlockSpec((1, T * two_u), lambda i: (0, 0)),       # b_dup
                pl.BlockSpec((T, T * two_u), lambda i: (0, 0)),       # msel
                pl.BlockSpec((1, T * two_u), lambda i: (0, 0)),       # psel
            ],
            out_specs=pl.BlockSpec((bv, T * two_u), lambda i: (i, 0)),
        ),
        compiler_params=pltpu.CompilerParams(
            dimension_semantics=("parallel",),
            vmem_limit_bytes=int(vmem_budget),
        ),
        cost_estimate=cost,
    )(x2, m2, w_dup, b_dup, msel, psel)

    return out[:N].reshape(N, T, two_u)


def vfe_reference(x, mask, w_eff, b_eff):
    """Pure-JAX reference matching the PyTorch forward (BN in eval mode)."""
    h = jnp.maximum(jnp.einsum("ntc,cu->ntu", x, w_eff) + b_eff, 0.0)
    agg = jnp.max(h, axis=1, keepdims=True)
    rep = jnp.broadcast_to(agg, h.shape)
    concat = jnp.concatenate([h, rep], axis=2)
    return concat * mask.astype(jnp.float32)


def make_params(key):
    """Deterministic Linear(in, units) params; fold eval-mode BatchNorm1d."""
    kw, kb = jax.random.split(key)
    # PyTorch Linear default init: U(-1/sqrt(fan_in), 1/sqrt(fan_in))
    bound = 1.0 / jnp.sqrt(jnp.float32(IN_CHANNELS))
    w = jax.random.uniform(kw, (UNITS, IN_CHANNELS), jnp.float32, -bound, bound)
    b = jax.random.uniform(kb, (UNITS,), jnp.float32, -bound, bound)
    # BatchNorm1d defaults: gamma=1, beta=0, running_mean=0, running_var=1
    scale = 1.0 / jnp.sqrt(1.0 + BN_EPS)        # gamma / sqrt(var + eps)
    w_eff = w.T * scale                          # (C_in, UNITS)
    b_eff = b * scale                            # (UNITS,)
    return w_eff, b_eff


if __name__ == "__main__":
    key = jax.random.PRNGKey(0)
    k_x, k_m, k_p = jax.random.split(key, 3)

    N = 200                     # num_voxels (ragged vs block -> exercises padding)
    T = MAX_PTS_PER_VOXEL       # max_pts
    C = IN_CHANNELS

    x = jax.random.normal(k_x, (N, T, C), jnp.float32)
    mask = (jax.random.uniform(k_m, (N, T, 1)) > 0.3)   # bool mask per point

    w_eff, b_eff = make_params(k_p)
    ref = vfe_reference(x, mask, w_eff, b_eff)

    # Default (large-block) configuration.
    out = vfe_forward(x, mask, w_eff, b_eff)
    out = jax.block_until_ready(out)
    assert out.shape == (N, T, OUT_CHANNELS)
    err = float(jnp.max(jnp.abs(out - ref)))
    assert jnp.allclose(out, ref, atol=1e-4, rtol=1e-4), err

    # Small-block configuration (multi-block grid + zero-padded tail).
    out_small = vfe_forward(x, mask, w_eff, b_eff, block_voxels=64)
    out_small = jax.block_until_ready(out_small)
    err_small = float(jnp.max(jnp.abs(out_small - ref)))
    assert jnp.allclose(out_small, ref, atol=1e-4, rtol=1e-4), err_small

    print("KERNEL_OK")
</pallas_src>

<mosaic_0001>
module attributes {stable_mosaic.version = 11 : i64} {
  func.func @vfe_kernel(%arg0: i32, %arg1: memref<200x64xf32, #tpu.memory_space<vmem>>, %arg2: memref<200x8xf32, #tpu.memory_space<vmem>>, %arg3: memref<64x256xf32, #tpu.memory_space<vmem>>, %arg4: memref<1x256xf32, #tpu.memory_space<vmem>>, %arg5: memref<8x256xf32, #tpu.memory_space<vmem>>, %arg6: memref<1x256xf32, #tpu.memory_space<vmem>>, %arg7: memref<200x256xf32, #tpu.memory_space<vmem>>) attributes {dimension_semantics = [#tpu.dimension_semantics<parallel>], iteration_bounds = array<i64: 1>, scalar_prefetch = 0 : i64, scratch_operands = 0 : i64, tpu.core_type = #tpu.core_type<tc>, window_params = [{transform_indices = @transform_0, window_bounds = array<i64: 200, 64>}, {transform_indices = @transform_1, window_bounds = array<i64: 200, 8>}, {pipeline_mode = #tpu.pipeline_mode<synchronous>, transform_indices = @transform_2, window_bounds = array<i64: 64, 256>}, {pipeline_mode = #tpu.pipeline_mode<synchronous>, transform_indices = @transform_3, window_bounds = array<i64: 1, 256>}, {pipeline_mode = #tpu.pipeline_mode<synchronous>, transform_indices = @transform_4, window_bounds = array<i64: 8, 256>}, {pipeline_mode = #tpu.pipeline_mode<synchronous>, transform_indices = @transform_5, window_bounds = array<i64: 1, 256>}, {transform_indices = @transform_6, window_bounds = array<i64: 200, 256>}]} {
    %c0 = arith.constant 0 : index
    %c0_0 = arith.constant 0 : index
    %0 = vector.load %arg1[%c0, %c0_0] : memref<200x64xf32, #tpu.memory_space<vmem>>, vector<200x64xf32>
    %c0_1 = arith.constant 0 : index
    %c0_2 = arith.constant 0 : index
    %1 = vector.load %arg3[%c0_1, %c0_2] : memref<64x256xf32, #tpu.memory_space<vmem>>, vector<64x256xf32>
    %cst = arith.constant dense<0.000000e+00> : vector<200x256xf32>
    %2 = tpu.matmul %0, %1, %cst {dimension_numbers = #tpu.dot_dimension_numbers<[1], [0], [0], [1], [0, 0, 1, 1], [], []>} : vector<200x64xf32>, vector<64x256xf32>, vector<200x256xf32> -> vector<200x256xf32>
    %c0_3 = arith.constant 0 : index
    %c0_4 = arith.constant 0 : index
    %3 = vector.load %arg4[%c0_3, %c0_4] : memref<1x256xf32, #tpu.memory_space<vmem>>, vector<1x256xf32>
    %4 = vector.broadcast %3 : vector<1x256xf32> to vector<200x256xf32>
    %5 = arith.addf %2, %4 : vector<200x256xf32>
    %cst_5 = arith.constant 0.000000e+00 : f32
    %6 = vector.broadcast %cst_5 : f32 to vector<200x256xf32>
    %7 = arith.maximumf %5, %6 : vector<200x256xf32>
    %c32_i32 = arith.constant 32 : i32
    %8 = tpu.dynamic_rotate %7 by %c32_i32 dim 1 : vector<200x256xf32>, i32 -> vector<200x256xf32>
    %9 = arith.maximumf %7, %8 : vector<200x256xf32>
    %c64_i32 = arith.constant 64 : i32
    %10 = tpu.dynamic_rotate %9 by %c64_i32 dim 1 : vector<200x256xf32>, i32 -> vector<200x256xf32>
    %11 = arith.maximumf %9, %10 : vector<200x256xf32>
    %c128_i32 = arith.constant 128 : i32
    %12 = tpu.dynamic_rotate %11 by %c128_i32 dim 1 : vector<200x256xf32>, i32 -> vector<200x256xf32>
    %13 = arith.maximumf %11, %12 : vector<200x256xf32>
    %c0_6 = arith.constant 0 : index
    %c0_7 = arith.constant 0 : index
    %14 = vector.load %arg6[%c0_6, %c0_7] : memref<1x256xf32, #tpu.memory_space<vmem>>, vector<1x256xf32>
    %cst_8 = arith.constant 5.000000e-01 : f32
    %15 = vector.broadcast %cst_8 : f32 to vector<1x256xf32>
    %16 = arith.cmpf ogt, %14, %15 : vector<1x256xf32>
    %17 = vector.shape_cast %16 : vector<1x256xi1> to vector<1x256xi1>
    %18 = vector.broadcast %17 : vector<1x256xi1> to vector<200x256xi1>
    %19 = arith.select %18, %7, %13 : vector<200x256xi1>, vector<200x256xf32>
    %c0_9 = arith.constant 0 : index
    %c0_10 = arith.constant 0 : index
    %20 = vector.load %arg2[%c0_9, %c0_10] : memref<200x8xf32, #tpu.memory_space<vmem>>, vector<200x8xf32>
    %c0_11 = arith.constant 0 : index
    %c0_12 = arith.constant 0 : index
    %21 = vector.load %arg5[%c0_11, %c0_12] : memref<8x256xf32, #tpu.memory_space<vmem>>, vector<8x256xf32>
    %cst_13 = arith.constant dense<0.000000e+00> : vector<200x256xf32>
    %22 = tpu.matmul %20, %21, %cst_13 {dimension_numbers = #tpu.dot_dimension_numbers<[1], [0], [0], [1], [0, 0, 1, 1], [], []>} : vector<200x8xf32>, vector<8x256xf32>, vector<200x256xf32> -> vector<200x256xf32>
    %23 = arith.mulf %19, %22 : vector<200x256xf32>
    %c0_14 = arith.constant 0 : index
    %c0_15 = arith.constant 0 : index
    %24 = vector.load %arg7[%c0_14, %c0_15] : memref<200x256xf32, #tpu.memory_space<vmem>>, vector<200x256xf32>
    tpu.vector_store %arg7[%c0_14, %c0_15], %23 {strides = array<i32>} : memref<200x256xf32, #tpu.memory_space<vmem>>, vector<200x256xf32>,
    return
  }
  func.func @transform_0(%arg0: i32) -> (i32, i32) {
    %c0_i32 = arith.constant 0 : i32
    %c0_i32_0 = arith.constant 0 : i32
    return %arg0, %c0_i32 : i32, i32
  }
  func.func @transform_1(%arg0: i32) -> (i32, i32) {
    %c0_i32 = arith.constant 0 : i32
    %c0_i32_0 = arith.constant 0 : i32
    return %arg0, %c0_i32 : i32, i32
  }
  func.func @transform_2(%arg0: i32) -> (i32, i32) {
    %c0_i32 = arith.constant 0 : i32
    %c0_i32_0 = arith.constant 0 : i32
    %c0_i32_1 = arith.constant 0 : i32
    return %c0_i32, %c0_i32_0 : i32, i32
  }
  func.func @transform_3(%arg0: i32) -> (i32, i32) {
    %c0_i32 = arith.constant 0 : i32
    %c0_i32_0 = arith.constant 0 : i32
    %c0_i32_1 = arith.constant 0 : i32
    return %c0_i32, %c0_i32_0 : i32, i32
  }
  func.func @transform_4(%arg0: i32) -> (i32, i32) {
    %c0_i32 = arith.constant 0 : i32
    %c0_i32_0 = arith.constant 0 : i32
    %c0_i32_1 = arith.constant 0 : i32
    return %c0_i32, %c0_i32_0 : i32, i32
  }
  func.func @transform_5(%arg0: i32) -> (i32, i32) {
    %c0_i32 = arith.constant 0 : i32
    %c0_i32_0 = arith.constant 0 : i32
    %c0_i32_1 = arith.constant 0 : i32
    return %c0_i32, %c0_i32_0 : i32, i32
  }
  func.func @transform_6(%arg0: i32) -> (i32, i32) {
    %c0_i32 = arith.constant 0 : i32
    %c0_i32_0 = arith.constant 0 : i32
    return %arg0, %c0_i32 : i32, i32
  }
}

</mosaic_0001>

<llo_original>
// kernel: tpu_custom_call.1
$region0: #{tpu_custom_call.1}
  #allocation0 [shape = 'u32[]', space=smem, size = 0x4, offset = 0x4, fixed_abs, tag = 'smem constant byte address 0x4 - core index']
  #allocation1 [shape = 'u32[72,128]{1,0:T(1,128)}', space=vmem, size = 0x9000, scoped, tag = 'internal scratch']
  %s0 = inlined_call_operand.vmem [shape: f32[200,64], index: 0, kind: input, shape index: {}]
  %s1 = inlined_call_operand.vmem [shape: f32[200,8], index: 1, kind: input, shape index: {}]
  %s2 = inlined_call_operand.vmem [shape: f32[64,256], index: 2, kind: input, shape index: {}]
  %s3 = inlined_call_operand.vmem [shape: f32[1,256], index: 3, kind: input, shape index: {}]
  %s4 = inlined_call_operand.vmem [shape: f32[8,256], index: 4, kind: input, shape index: {}]
  %s5 = inlined_call_operand.vmem [shape: f32[1,256], index: 5, kind: input, shape index: {}]
  %s6 = inlined_call_operand.hbm [shape: f32[200,256], index: 6, kind: output, shape index: {}]
  %s7 = sld [smem:[#allocation0]]
  $region34: #{tpu_custom_call.1} parent=0
    _
  %s9 = ssub.s32 1, %s7
  %s10 = scalar_select 0, %s9, %s7
  $region1: #{tpu_custom_call.1} parent=0
    #allocation2 [shape = 'u8[204800]{0}', space=vmem, size = 0x32000, scoped, tag = 'output window, operand 0, single buffered']
    #allocation3 [shape = 's32[1]{0}', space=sflag, size = 0x4, scoped, tag = 'scoped memory for tpu_custom_call.1']
    %11 = vsyncpa [#allocation3], 0
    // Predicated region
    $region2: #{tpu_custom_call.1} parent=1 // pred_check
      _
    $region3: #{tpu_custom_call.1} parent=1 // pred_check_branch
      %13 = sbr.rel (0) target = $region5
    $region4: #{tpu_custom_call.1} parent=1 // pred_region
      _
    $region5: #{tpu_custom_call.1} parent=1 // pred_fallthru
      _
    // Predicated region
    $region6: #{tpu_custom_call.1} parent=1 // pred_check
      _
    $region7: #{tpu_custom_call.1} parent=1 // pred_check_branch
      %15 = sbr.rel (0) target = $region9
    $region8: #{tpu_custom_call.1} parent=1 // pred_region
      _
    $region9: #{tpu_custom_call.1} parent=1 // pred_fallthru
      _
    // Predicated region
    $region10: #{tpu_custom_call.1} parent=1 // pred_check
      _
    $region11: #{tpu_custom_call.1} parent=1 // pred_check_branch
      %17 = sbr.rel (0) target = $region13
    $region12: #{tpu_custom_call.1} parent=1 // pred_region
      _
    $region13: #{tpu_custom_call.1} parent=1 // pred_fallthru
      _
    // Predicated region
    $region14: #{tpu_custom_call.1} parent=1 // pred_check
      _
    $region15: #{tpu_custom_call.1} parent=1 // pred_check_branch
      %19 = sbr.rel (0) target = $region17
    $region16: #{tpu_custom_call.1} parent=1 // pred_region
      _
    $region17: #{tpu_custom_call.1} parent=1 // pred_fallthru
      _
    // Predicated region
    $region18: #{tpu_custom_call.1} parent=1 // pred_check
      _
    $region19: #{tpu_custom_call.1} parent=1 // pred_check_branch
      %21 = sbr.rel (0) target = $region21
    $region20: #{tpu_custom_call.1} parent=1 // pred_region
      _
    $region21: #{tpu_custom_call.1} parent=1 // pred_fallthru
      _
    // Predicated region
    $region22: #{tpu_custom_call.1} parent=1 // pred_check
      _
    $region23: #{tpu_custom_call.1} parent=1 // pred_check_branch
      %23 = sbr.rel (0) target = $region25
    $region24: #{tpu_custom_call.1} parent=1 // pred_region
      _
    $region25: #{tpu_custom_call.1} parent=1 // pred_fallthru
      _
    %v24 = vld [vmem:[%s0] sm:$0xff]
    %v25 = vld [vmem:[%s0 + $0x8] sm:$0xff]
    %v26 = vld [vmem:[%s0 + $0x10] sm:$0xff]
    %v27 = vld [vmem:[%s0 + $0x18] sm:$0xff]
    %v28 = vld [vmem:[%s0 + $0x20] sm:$0xff]
    %v29 = vld [vmem:[%s0 + $0x28] sm:$0xff]
    %v30 = vld [vmem:[%s0 + $0x30] sm:$0xff]
    %v31 = vld [vmem:[%s0 + $0x38] sm:$0xff]
    %v32 = vld [vmem:[%s0 + $0x40] sm:$0xff]
    %v33 = vld [vmem:[%s0 + $0x48] sm:$0xff]
    %v34 = vld [vmem:[%s0 + $0x50] sm:$0xff]
    %v35 = vld [vmem:[%s0 + $0x58] sm:$0xff]
    %v36 = vld [vmem:[%s0 + $0x60] sm:$0xff]
    %v37 = vld [vmem:[%s0 + $0x68] sm:$0xff]
    %v38 = vld [vmem:[%s0 + $0x70] sm:$0xff]
    %v39 = vld [vmem:[%s0 + $0x78] sm:$0xff]
    %v40 = vld [vmem:[%s0 + $0x80] sm:$0xff]
    %v41 = vld [vmem:[%s0 + $0x88] sm:$0xff]
    %v42 = vld [vmem:[%s0 + $0x90] sm:$0xff]
    %v43 = vld [vmem:[%s0 + $0x98] sm:$0xff]
    %v44 = vld [vmem:[%s0 + $0xa0] sm:$0xff]
    %v45 = vld [vmem:[%s0 + $0xa8] sm:$0xff]
    %v46 = vld [vmem:[%s0 + $0xb0] sm:$0xff]
    %v47 = vld [vmem:[%s0 + $0xb8] sm:$0xff]
    %v48 = vld [vmem:[%s0 + $0xc0] sm:$0xff]
    %v49 = vld [vmem:[%s2] sm:$0xff]
    %v50 = vld [vmem:[%s2 + $0x8] sm:$0xff]
    %v51 = vld [vmem:[%s2 + $0x10] sm:$0xff]
    %v52 = vld [vmem:[%s2 + $0x18] sm:$0xff]
    %v53 = vld [vmem:[%s2 + $0x20] sm:$0xff]
    %v54 = vld [vmem:[%s2 + $0x28] sm:$0xff]
    %v55 = vld [vmem:[%s2 + $0x30] sm:$0xff]
    %v56 = vld [vmem:[%s2 + $0x38] sm:$0xff]
    %v57 = vld [vmem:[%s2 + $0x40] sm:$0xff]
    %v58 = vld [vmem:[%s2 + $0x48] sm:$0xff]
    %v59 = vld [vmem:[%s2 + $0x50] sm:$0xff]
    %v60 = vld [vmem:[%s2 + $0x58] sm:$0xff]
    %v61 = vld [vmem:[%s2 + $0x60] sm:$0xff]
    %v62 = vld [vmem:[%s2 + $0x68] sm:$0xff]
    %v63 = vld [vmem:[%s2 + $0x70] sm:$0xff]
    %v64 = vld [vmem:[%s2 + $0x78] sm:$0xff]
    %v65 = vld [vmem:[%s3] sm:$0x3]
    %v67 = vperm.slane %v65, 0
    %v68 = vperm.slane %v65, 1
    %vm71 = vcmask 523264
    %v73 = vsel %vm71, %v24, 0
    %v76 = vsel %vm71, %v25, 0
    %v79 = vsel %vm71, %v26, 0
    %v82 = vsel %vm71, %v27, 0
    %v85 = vsel %vm71, %v28, 0
    %v88 = vsel %vm71, %v29, 0
    %v91 = vsel %vm71, %v30, 0
    %v94 = vsel %vm71, %v31, 0
    %v97 = vsel %vm71, %v32, 0
    %v100 = vsel %vm71, %v33, 0
    %v103 = vsel %vm71, %v34, 0
    %v106 = vsel %vm71, %v35, 0
    %v109 = vsel %vm71, %v36, 0
    %v112 = vsel %vm71, %v37, 0
    %v115 = vsel %vm71, %v38, 0
    %v118 = vsel %vm71, %v39, 0
    %v121 = vsel %vm71, %v40, 0
    %v124 = vsel %vm71, %v41, 0
    %v127 = vsel %vm71, %v42, 0
    %v130 = vsel %vm71, %v43, 0
    %v133 = vsel %vm71, %v44, 0
    %v136 = vsel %vm71, %v45, 0
    %v139 = vsel %vm71, %v46, 0
    %v142 = vsel %vm71, %v47, 0
    %v145 = vsel %vm71, %v48, 0
    %147 = vmatpush.msra.mxu0 0.0
    %148 = vmatpush.msra.mxu0 0.0
    %149 = vmatpush.msra.mxu0 0.0
    %150 = vmatpush.msra.mxu0 0.0
    %151 = vmatpush.msra.mxu0 0.0
    %152 = vmatpush.msra.mxu0 0.0
    %153 = vmatpush.msra.mxu0 0.0
    %154 = vmatpush.msra.mxu0 0.0
    %155 = vmatpush.msra.mxu0 %v63
    %156 = vmatpush.msra.mxu0 %v61
    %157 = vmatpush.msra.mxu0 %v59
    %158 = vmatpush.msra.mxu0 %v57
    %159 = vmatpush.msra.mxu0 %v55
    %160 = vmatpush.msra.mxu0 %v53
    %161 = vmatpush.msra.mxu0 %v51
    %162 = vmatpush.msra.mxu0 %v49
    %163 = vmatmul.f32.gmra.mxu0 %v73
    %v164 = vpop.f32.mrf.mxu0
    %v165 = vadd.f32 %v67, %v164
    %166 = vmatmul.f32.gmra.mxu0 %v76
    %v167 = vpop.f32.mrf.mxu0
    %v168 = vadd.f32 %v67, %v167
    %169 = vmatmul.f32.gmra.mxu0 %v79
    %v170 = vpop.f32.mrf.mxu0
    %v171 = vadd.f32 %v67, %v170
    %172 = vmatmul.f32.gmra.mxu0 %v82
    %v173 = vpop.f32.mrf.mxu0
    %v174 = vadd.f32 %v67, %v173
    %175 = vmatmul.f32.gmra.mxu0 %v85
    %v176 = vpop.f32.mrf.mxu0
    %v177 = vadd.f32 %v67, %v176
    %178 = vmatmul.f32.gmra.mxu0 %v88
    %v179 = vpop.f32.mrf.mxu0
    %v180 = vadd.f32 %v67, %v179
    %181 = vmatmul.f32.gmra.mxu0 %v91
    %v182 = vpop.f32.mrf.mxu0
    %v183 = vadd.f32 %v67, %v182
    %184 = vmatmul.f32.gmra.mxu0 %v94
    %v185 = vpop.f32.mrf.mxu0
    %v186 = vadd.f32 %v67, %v185
    %187 = vmatmul.f32.gmra.mxu0 %v97
    %v188 = vpop.f32.mrf.mxu0
    %v189 = vadd.f32 %v67, %v188
    %190 = vmatmul.f32.gmra.mxu0 %v100
    %v191 = vpop.f32.mrf.mxu0
    %v192 = vadd.f32 %v67, %v191
    %193 = vmatmul.f32.gmra.mxu0 %v103
    %v194 = vpop.f32.mrf.mxu0
    %v195 = vadd.f32 %v67, %v194
    %196 = vmatmul.f32.gmra.mxu0 %v106
    %v197 = vpop.f32.mrf.mxu0
    %v198 = vadd.f32 %v67, %v197
    %199 = vmatmul.f32.gmra.mxu0 %v109
    %v200 = vpop.f32.mrf.mxu0
    %v201 = vadd.f32 %v67, %v200
    %202 = vmatmul.f32.gmra.mxu0 %v112
    %v203 = vpop.f32.mrf.mxu0
    %v204 = vadd.f32 %v67, %v203
    %205 = vmatmul.f32.gmra.mxu0 %v115
    %v206 = vpop.f32.mrf.mxu0
    %v207 = vadd.f32 %v67, %v206
    %208 = vmatmul.f32.gmra.mxu0 %v118
    %v209 = vpop.f32.mrf.mxu0
    %v210 = vadd.f32 %v67, %v209
    %211 = vmatmul.f32.gmra.mxu0 %v121
    %v212 = vpop.f32.mrf.mxu0
    %v213 = vadd.f32 %v67, %v212
    %214 = vmatmul.f32.gmra.mxu0 %v124
    %v215 = vpop.f32.mrf.mxu0
    %v216 = vadd.f32 %v67, %v215
    %217 = vmatmul.f32.gmra.mxu0 %v127
    %v218 = vpop.f32.mrf.mxu0
    %v219 = vadd.f32 %v67, %v218
    %220 = vmatmul.f32.gmra.mxu0 %v130
    %v221 = vpop.f32.mrf.mxu0
    %v222 = vadd.f32 %v67, %v221
    %223 = vmatmul.f32.gmra.mxu0 %v133
    %v224 = vpop.f32.mrf.mxu0
    %v225 = vadd.f32 %v67, %v224
    %226 = vmatmul.f32.gmra.mxu0 %v136
    %v227 = vpop.f32.mrf.mxu0
    %v228 = vadd.f32 %v67, %v227
    %229 = vmatmul.f32.gmra.mxu0 %v139
    %v230 = vpop.f32.mrf.mxu0
    %v231 = vadd.f32 %v67, %v230
    %232 = vmatmul.f32.gmra.mxu0 %v142
    %v233 = vpop.f32.mrf.mxu0
    %v234 = vadd.f32 %v67, %v233
    %235 = vmatmul.f32.gmra.mxu0 %v145
    %v236 = vpop.f32.mrf.mxu0
    %v237 = vadd.f32 %v67, %v236
    %238 = vdwg.mxu0
    %239 = vmatpush.msra.mxu0 0.0
    %240 = vmatpush.msra.mxu0 0.0
    %241 = vmatpush.msra.mxu0 0.0
    %242 = vmatpush.msra.mxu0 0.0
    %243 = vmatpush.msra.mxu0 0.0
    %244 = vmatpush.msra.mxu0 0.0
    %245 = vmatpush.msra.mxu0 0.0
    %246 = vmatpush.msra.mxu0 0.0
    %247 = vmatpush.msra.mxu0 %v64
    %248 = vmatpush.msra.mxu0 %v62
    %249 = vmatpush.msra.mxu0 %v60
    %250 = vmatpush.msra.mxu0 %v58
    %251 = vmatpush.msra.mxu0 %v56
    %252 = vmatpush.msra.mxu0 %v54
    %253 = vmatpush.msra.mxu0 %v52
    %254 = vmatpush.msra.mxu0 %v50
    %255 = vmatmul.f32.gmra.mxu0 %v73
    %v256 = vpop.f32.mrf.mxu0
    %v257 = vadd.f32 %v68, %v256
    %258 = vmatmul.f32.gmra.mxu0 %v76
    %v259 = vpop.f32.mrf.mxu0
    %v260 = vadd.f32 %v68, %v259
    %261 = vmatmul.f32.gmra.mxu0 %v79
    %v262 = vpop.f32.mrf.mxu0
    %v263 = vadd.f32 %v68, %v262
    %264 = vmatmul.f32.gmra.mxu0 %v82
    %v265 = vpop.f32.mrf.mxu0
    %v266 = vadd.f32 %v68, %v265
    %267 = vmatmul.f32.gmra.mxu0 %v85
    %v268 = vpop.f32.mrf.mxu0
    %v269 = vadd.f32 %v68, %v268
    %270 = vmatmul.f32.gmra.mxu0 %v88
    %v271 = vpop.f32.mrf.mxu0
    %v272 = vadd.f32 %v68, %v271
    %273 = vmatmul.f32.gmra.mxu0 %v91
    %v274 = vpop.f32.mrf.mxu0
    %v275 = vadd.f32 %v68, %v274
    %276 = vmatmul.f32.gmra.mxu0 %v94
    %v277 = vpop.f32.mrf.mxu0
    %v278 = vadd.f32 %v68, %v277
    %279 = vmatmul.f32.gmra.mxu0 %v97
    %v280 = vpop.f32.mrf.mxu0
    %v281 = vadd.f32 %v68, %v280
    %282 = vmatmul.f32.gmra.mxu0 %v100
    %v283 = vpop.f32.mrf.mxu0
    %v284 = vadd.f32 %v68, %v283
    %285 = vmatmul.f32.gmra.mxu0 %v103
    %v286 = vpop.f32.mrf.mxu0
    %v287 = vadd.f32 %v68, %v286
    %288 = vmatmul.f32.gmra.mxu0 %v106
    %v289 = vpop.f32.mrf.mxu0
    %v290 = vadd.f32 %v68, %v289
    %291 = vmatmul.f32.gmra.mxu0 %v109
    %v292 = vpop.f32.mrf.mxu0
    %v293 = vadd.f32 %v68, %v292
    %294 = vmatmul.f32.gmra.mxu0 %v112
    %v295 = vpop.f32.mrf.mxu0
    %v296 = vadd.f32 %v68, %v295
    %297 = vmatmul.f32.gmra.mxu0 %v115
    %v298 = vpop.f32.mrf.mxu0
    %v299 = vadd.f32 %v68, %v298
    %300 = vmatmul.f32.gmra.mxu0 %v118
    %v301 = vpop.f32.mrf.mxu0
    %v302 = vadd.f32 %v68, %v301
    %303 = vmatmul.f32.gmra.mxu0 %v121
    %v304 = vpop.f32.mrf.mxu0
    %v305 = vadd.f32 %v68, %v304
    %306 = vmatmul.f32.gmra.mxu0 %v124
    %v307 = vpop.f32.mrf.mxu0
    %v308 = vadd.f32 %v68, %v307
    %309 = vmatmul.f32.gmra.mxu0 %v127
    %v310 = vpop.f32.mrf.mxu0
    %v311 = vadd.f32 %v68, %v310
    %312 = vmatmul.f32.gmra.mxu0 %v130
    %v313 = vpop.f32.mrf.mxu0
    %v314 = vadd.f32 %v68, %v313
    %315 = vmatmul.f32.gmra.mxu0 %v133
    %v316 = vpop.f32.mrf.mxu0
    %v317 = vadd.f32 %v68, %v316
    %318 = vmatmul.f32.gmra.mxu0 %v136
    %v319 = vpop.f32.mrf.mxu0
    %v320 = vadd.f32 %v68, %v319
    %321 = vmatmul.f32.gmra.mxu0 %v139
    %v322 = vpop.f32.mrf.mxu0
    %v323 = vadd.f32 %v68, %v322
    %324 = vmatmul.f32.gmra.mxu0 %v142
    %v325 = vpop.f32.mrf.mxu0
    %v326 = vadd.f32 %v68, %v325
    %327 = vmatmul.f32.gmra.mxu0 %v145
    %v328 = vpop.f32.mrf.mxu0
    %v329 = vadd.f32 %v68, %v328
    %330 = vdwg.mxu0
    %v331 = vmax.f32 %v165, 0.0
    %v332 = vmax.f32 %v257, 0.0
    %v333 = vmax.f32 %v168, 0.0
    %v334 = vmax.f32 %v260, 0.0
    %v335 = vmax.f32 %v171, 0.0
    %v336 = vmax.f32 %v263, 0.0
    %v337 = vmax.f32 %v174, 0.0
    %v338 = vmax.f32 %v266, 0.0
    %v339 = vmax.f32 %v177, 0.0
    %v340 = vmax.f32 %v269, 0.0
    %v341 = vmax.f32 %v180, 0.0
    %v342 = vmax.f32 %v272, 0.0
    %v343 = vmax.f32 %v183, 0.0
    %v344 = vmax.f32 %v275, 0.0
    %v345 = vmax.f32 %v186, 0.0
    %v346 = vmax.f32 %v278, 0.0
    %v347 = vmax.f32 %v189, 0.0
    %v348 = vmax.f32 %v281, 0.0
    %v349 = vmax.f32 %v192, 0.0
    %v350 = vmax.f32 %v284, 0.0
    %v351 = vmax.f32 %v195, 0.0
    %v352 = vmax.f32 %v287, 0.0
    %v353 = vmax.f32 %v198, 0.0
    %v354 = vmax.f32 %v290, 0.0
    %v355 = vmax.f32 %v201, 0.0
    %v356 = vmax.f32 %v293, 0.0
    %v357 = vmax.f32 %v204, 0.0
    %v358 = vmax.f32 %v296, 0.0
    %v359 = vmax.f32 %v207, 0.0
    %v360 = vmax.f32 %v299, 0.0
    %v361 = vmax.f32 %v210, 0.0
    %v362 = vmax.f32 %v302, 0.0
    %v363 = vmax.f32 %v213, 0.0
    %v364 = vmax.f32 %v305, 0.0
    %v365 = vmax.f32 %v216, 0.0
    %v366 = vmax.f32 %v308, 0.0
    %v367 = vmax.f32 %v219, 0.0
    %v368 = vmax.f32 %v311, 0.0
    %v369 = vmax.f32 %v222, 0.0
    %v370 = vmax.f32 %v314, 0.0
    %v371 = vmax.f32 %v225, 0.0
    %v372 = vmax.f32 %v317, 0.0
    %v373 = vmax.f32 %v228, 0.0
    %v374 = vmax.f32 %v320, 0.0
    %v375 = vmax.f32 %v231, 0.0
    %v376 = vmax.f32 %v323, 0.0
    %v377 = vmax.f32 %v234, 0.0
    %v378 = vmax.f32 %v326, 0.0
    %v379 = vmax.f32 %v237, 0.0
    %v380 = vmax.f32 %v329, 0.0
    %381 = vrot.lane.b32.xlu0 %v331, 32
    %v382 = vpop.permute.xlu0 %381
    %383 = vrot.lane.b32.xlu0 %v333, 32
    %v384 = vpop.permute.xlu0 %383
    %385 = vrot.lane.b32.xlu0 %v335, 32
    %v386 = vpop.permute.xlu0 %385
    %387 = vrot.lane.b32.xlu0 %v337, 32
    %v388 = vpop.permute.xlu0 %387
    %389 = vrot.lane.b32.xlu0 %v339, 32
    %v390 = vpop.permute.xlu0 %389
    %391 = vrot.lane.b32.xlu0 %v341, 32
    %v392 = vpop.permute.xlu0 %391
    %393 = vrot.lane.b32.xlu0 %v343, 32
    %v394 = vpop.permute.xlu0 %393
    %395 = vrot.lane.b32.xlu0 %v345, 32
    %v396 = vpop.permute.xlu0 %395
    %397 = vrot.lane.b32.xlu0 %v347, 32
    %v398 = vpop.permute.xlu0 %397
    %399 = vrot.lane.b32.xlu0 %v349, 32
    %v400 = vpop.permute.xlu0 %399
    %401 = vrot.lane.b32.xlu0 %v351, 32
    %v402 = vpop.permute.xlu0 %401
    %403 = vrot.lane.b32.xlu0 %v353, 32
    %v404 = vpop.permute.xlu0 %403
    %405 = vrot.lane.b32.xlu0 %v355, 32
    %v406 = vpop.permute.xlu0 %405
    %407 = vrot.lane.b32.xlu0 %v357, 32
    %v408 = vpop.permute.xlu0 %407
    %409 = vrot.lane.b32.xlu0 %v359, 32
    %v410 = vpop.permute.xlu0 %409
    %411 = vrot.lane.b32.xlu0 %v361, 32
    %v412 = vpop.permute.xlu0 %411
    %413 = vrot.lane.b32.xlu0 %v363, 32
    %v414 = vpop.permute.xlu0 %413
    %415 = vrot.lane.b32.xlu0 %v365, 32
    %v416 = vpop.permute.xlu0 %415
    %417 = vrot.lane.b32.xlu0 %v367, 32
    %v418 = vpop.permute.xlu0 %417
    %419 = vrot.lane.b32.xlu0 %v369, 32
    %v420 = vpop.permute.xlu0 %419
    %421 = vrot.lane.b32.xlu0 %v371, 32
    %v422 = vpop.permute.xlu0 %421
    %423 = vrot.lane.b32.xlu0 %v373, 32
    %v424 = vpop.permute.xlu0 %423
    %425 = vrot.lane.b32.xlu0 %v375, 32
    %v426 = vpop.permute.xlu0 %425
    %427 = vrot.lane.b32.xlu0 %v377, 32
    %v428 = vpop.permute.xlu0 %427
    %429 = vrot.lane.b32.xlu0 %v379, 32
    %v430 = vpop.permute.xlu0 %429
    %431 = vrot.lane.b32.xlu0 %v332, 32
    %v432 = vpop.permute.xlu0 %431
    %433 = vrot.lane.b32.xlu0 %v334, 32
    %v434 = vpop.permute.xlu0 %433
    %435 = vrot.lane.b32.xlu0 %v336, 32
    %v436 = vpop.permute.xlu0 %435
    %437 = vrot.lane.b32.xlu0 %v338, 32
    %v438 = vpop.permute.xlu0 %437
    %439 = vrot.lane.b32.xlu0 %v340, 32
    %v440 = vpop.permute.xlu0 %439
    %441 = vrot.lane.b32.xlu0 %v342, 32
    %v442 = vpop.permute.xlu0 %441
    %443 = vrot.lane.b32.xlu0 %v344, 32
    %v444 = vpop.permute.xlu0 %443
    %445 = vrot.lane.b32.xlu0 %v346, 32
    %v446 = vpop.permute.xlu0 %445
    %447 = vrot.lane.b32.xlu0 %v348, 32
    %v448 = vpop.permute.xlu0 %447
    %449 = vrot.lane.b32.xlu0 %v350, 32
    %v450 = vpop.permute.xlu0 %449
    %451 = vrot.lane.b32.xlu0 %v352, 32
    %v452 = vpop.permute.xlu0 %451
    %453 = vrot.lane.b32.xlu0 %v354, 32
    %v454 = vpop.permute.xlu0 %453
    %455 = vrot.lane.b32.xlu0 %v356, 32
    %v456 = vpop.permute.xlu0 %455
    %457 = vrot.lane.b32.xlu0 %v358, 32
    %v458 = vpop.permute.xlu0 %457
    %459 = vrot.lane.b32.xlu0 %v360, 32
    %v460 = vpop.permute.xlu0 %459
    %461 = vrot.lane.b32.xlu0 %v362, 32
    %v462 = vpop.permute.xlu0 %461
    %463 = vrot.lane.b32.xlu0 %v364, 32
    %v464 = vpop.permute.xlu0 %463
    %465 = vrot.lane.b32.xlu0 %v366, 32
    %v466 = vpop.permute.xlu0 %465
    %467 = vrot.lane.b32.xlu0 %v368, 32
    %v468 = vpop.permute.xlu0 %467
    %469 = vrot.lane.b32.xlu0 %v370, 32
    %v470 = vpop.permute.xlu0 %469
    %471 = vrot.lane.b32.xlu0 %v372, 32
    %v472 = vpop.permute.xlu0 %471
    %473 = vrot.lane.b32.xlu0 %v374, 32
    %v474 = vpop.permute.xlu0 %473
    %475 = vrot.lane.b32.xlu0 %v376, 32
    %v476 = vpop.permute.xlu0 %475
    %477 = vrot.lane.b32.xlu0 %v378, 32
    %v478 = vpop.permute.xlu0 %477
    %479 = vrot.lane.b32.xlu0 %v380, 32
    %v480 = vpop.permute.xlu0 %479
    %v481 = vlaneseq
    %v482 = vand.u32 %v481, 127
    %vm483 = vcmp.lt.s32.totalorder %v482, 32
    %v484 = vsel %vm483, %v382, %v432
    %v485 = vsel %vm483, %v384, %v434
    %v486 = vsel %vm483, %v386, %v436
    %v487 = vsel %vm483, %v388, %v438
    %v488 = vsel %vm483, %v390, %v440
    %v489 = vsel %vm483, %v392, %v442
    %v490 = vsel %vm483, %v394, %v444
    %v491 = vsel %vm483, %v396, %v446
    %v492 = vsel %vm483, %v398, %v448
    %v493 = vsel %vm483, %v400, %v450
    %v494 = vsel %vm483, %v402, %v452
    %v495 = vsel %vm483, %v404, %v454
    %v496 = vsel %vm483, %v406, %v456
    %v497 = vsel %vm483, %v408, %v458
    %v498 = vsel %vm483, %v410, %v460
    %v499 = vsel %vm483, %v412, %v462
    %v500 = vsel %vm483, %v414, %v464
    %v501 = vsel %vm483, %v416, %v466
    %v502 = vsel %vm483, %v418, %v468
    %v503 = vsel %vm483, %v420, %v470
    %v504 = vsel %vm483, %v422, %v472
    %v505 = vsel %vm483, %v424, %v474
    %v506 = vsel %vm483, %v426, %v476
    %v507 = vsel %vm483, %v428, %v478
    %v508 = vsel %vm483, %v430, %v480
    %v509 = vsel %vm483, %v432, %v382
    %v510 = vsel %vm483, %v434, %v384
    %v511 = vsel %vm483, %v436, %v386
    %v512 = vsel %vm483, %v438, %v388
    %v513 = vsel %vm483, %v440, %v390
    %v514 = vsel %vm483, %v442, %v392
    %v515 = vsel %vm483, %v444, %v394
    %v516 = vsel %vm483, %v446, %v396
    %v517 = vsel %vm483, %v448, %v398
    %v518 = vsel %vm483, %v450, %v400
    %v519 = vsel %vm483, %v452, %v402
    %v520 = vsel %vm483, %v454, %v404
    %v521 = vsel %vm483, %v456, %v406
    %v522 = vsel %vm483, %v458, %v408
    %v523 = vsel %vm483, %v460, %v410
    %v524 = vsel %vm483, %v462, %v412
    %v525 = vsel %vm483, %v464, %v414
    %v526 = vsel %vm483, %v466, %v416
    %v527 = vsel %vm483, %v468, %v418
    %v528 = vsel %vm483, %v470, %v420
    %v529 = vsel %vm483, %v472, %v422
    %v530 = vsel %vm483, %v474, %v424
    %v531 = vsel %vm483, %v476, %v426
    %v532 = vsel %vm483, %v478, %v428
    %v533 = vsel %vm483, %v480, %v430
    %v534 = vmax.f32 %v331, %v509
    %v535 = vmax.f32 %v332, %v484
    %v536 = vmax.f32 %v333, %v510
    %v537 = vmax.f32 %v334, %v485
    %v538 = vmax.f32 %v335, %v511
    %v539 = vmax.f32 %v336, %v486
    %v540 = vmax.f32 %v337, %v512
    %v541 = vmax.f32 %v338, %v487
    %v542 = vmax.f32 %v339, %v513
    %v543 = vmax.f32 %v340, %v488
    %v544 = vmax.f32 %v341, %v514
    %v545 = vmax.f32 %v342, %v489
    %v546 = vmax.f32 %v343, %v515
    %v547 = vmax.f32 %v344, %v490
    %v548 = vmax.f32 %v345, %v516
    %v549 = vmax.f32 %v346, %v491
    %v550 = vmax.f32 %v347, %v517
    %v551 = vmax.f32 %v348, %v492
    %v552 = vmax.f32 %v349, %v518
    %v553 = vmax.f32 %v350, %v493
    %v554 = vmax.f32 %v351, %v519
    %v555 = vmax.f32 %v352, %v494
    %v556 = vmax.f32 %v353, %v520
    %v557 = vmax.f32 %v354, %v495
    %v558 = vmax.f32 %v355, %v521
    %v559 = vmax.f32 %v356, %v496
    %v560 = vmax.f32 %v357, %v522
    %v561 = vmax.f32 %v358, %v497
    %v562 = vmax.f32 %v359, %v523
    %v563 = vmax.f32 %v360, %v498
    %v564 = vmax.f32 %v361, %v524
    %v565 = vmax.f32 %v362, %v499
    %v566 = vmax.f32 %v363, %v525
    %v567 = vmax.f32 %v364, %v500
    %v568 = vmax.f32 %v365, %v526
    %v569 = vmax.f32 %v366, %v501
    %v570 = vmax.f32 %v367, %v527
    %v571 = vmax.f32 %v368, %v502
    %v572 = vmax.f32 %v369, %v528
    %v573 = vmax.f32 %v370, %v503
    %v574 = vmax.f32 %v371, %v529
    %v575 = vmax.f32 %v372, %v504
    %v576 = vmax.f32 %v373, %v530
    %v577 = vmax.f32 %v374, %v505
    %v578 = vmax.f32 %v375, %v531
    %v579 = vmax.f32 %v376, %v506
    %v580 = vmax.f32 %v377, %v532
    %v581 = vmax.f32 %v378, %v507
    %v582 = vmax.f32 %v379, %v533
    %v583 = vmax.f32 %v380, %v508
    %584 = vrot.lane.b32.xlu0 %v534, 64
    %v585 = vpop.permute.xlu0 %584
    %586 = vrot.lane.b32.xlu0 %v536, 64
    %v587 = vpop.permute.xlu0 %586
    %588 = vrot.lane.b32.xlu0 %v538, 64
    %v589 = vpop.permute.xlu0 %588
    %590 = vrot.lane.b32.xlu0 %v540, 64
    %v591 = vpop.permute.xlu0 %590
    %592 = vrot.lane.b32.xlu0 %v542, 64
    %v593 = vpop.permute.xlu0 %592
    %594 = vrot.lane.b32.xlu0 %v544, 64
    %v595 = vpop.permute.xlu0 %594
    %596 = vrot.lane.b32.xlu0 %v546, 64
    %v597 = vpop.permute.xlu0 %596
    %598 = vrot.lane.b32.xlu0 %v548, 64
    %v599 = vpop.permute.xlu0 %598
    %600 = vrot.lane.b32.xlu0 %v550, 64
    %v601 = vpop.permute.xlu0 %600
    %602 = vrot.lane.b32.xlu0 %v552, 64
    %v603 = vpop.permute.xlu0 %602
    %604 = vrot.lane.b32.xlu0 %v554, 64
    %v605 = vpop.permute.xlu0 %604
    %606 = vrot.lane.b32.xlu0 %v556, 64
    %v607 = vpop.permute.xlu0 %606
    %608 = vrot.lane.b32.xlu0 %v558, 64
    %v609 = vpop.permute.xlu0 %608
    %610 = vrot.lane.b32.xlu0 %v560, 64
    %v611 = vpop.permute.xlu0 %610
    %612 = vrot.lane.b32.xlu0 %v562, 64
    %v613 = vpop.permute.xlu0 %612
    %614 = vrot.lane.b32.xlu0 %v564, 64
    %v615 = vpop.permute.xlu0 %614
    %616 = vrot.lane.b32.xlu0 %v566, 64
    %v617 = vpop.permute.xlu0 %616
    %618 = vrot.lane.b32.xlu0 %v568, 64
    %v619 = vpop.permute.xlu0 %618
    %620 = vrot.lane.b32.xlu0 %v570, 64
    %v621 = vpop.permute.xlu0 %620
    %622 = vrot.lane.b32.xlu0 %v572, 64
    %v623 = vpop.permute.xlu0 %622
    %624 = vrot.lane.b32.xlu0 %v574, 64
    %v625 = vpop.permute.xlu0 %624
    %626 = vrot.lane.b32.xlu0 %v576, 64
    %v627 = vpop.permute.xlu0 %626
    %628 = vrot.lane.b32.xlu0 %v578, 64
    %v629 = vpop.permute.xlu0 %628
    %630 = vrot.lane.b32.xlu0 %v580, 64
    %v631 = vpop.permute.xlu0 %630
    %632 = vrot.lane.b32.xlu0 %v582, 64
    %v633 = vpop.permute.xlu0 %632
    %634 = vrot.lane.b32.xlu0 %v535, 64
    %v635 = vpop.permute.xlu0 %634
    %636 = vrot.lane.b32.xlu0 %v537, 64
    %v637 = vpop.permute.xlu0 %636
    %638 = vrot.lane.b32.xlu0 %v539, 64
    %v639 = vpop.permute.xlu0 %638
    %640 = vrot.lane.b32.xlu0 %v541, 64
    %v641 = vpop.permute.xlu0 %640
    %642 = vrot.lane.b32.xlu0 %v543, 64
    %v643 = vpop.permute.xlu0 %642
    %644 = vrot.lane.b32.xlu0 %v545, 64
    %v645 = vpop.permute.xlu0 %644
    %646 = vrot.lane.b32.xlu0 %v547, 64
    %v647 = vpop.permute.xlu0 %646
    %648 = vrot.lane.b32.xlu0 %v549, 64
    %v649 = vpop.permute.xlu0 %648
    %650 = vrot.lane.b32.xlu0 %v551, 64
    %v651 = vpop.permute.xlu0 %650
    %652 = vrot.lane.b32.xlu0 %v553, 64
    %v653 = vpop.permute.xlu0 %652
    %654 = vrot.lane.b32.xlu0 %v555, 64
    %v655 = vpop.permute.xlu0 %654
    %656 = vrot.lane.b32.xlu0 %v557, 64
    %v657 = vpop.permute.xlu0 %656
    %658 = vrot.lane.b32.xlu0 %v559, 64
    %v659 = vpop.permute.xlu0 %658
    %660 = vrot.lane.b32.xlu0 %v561, 64
    %v661 = vpop.permute.xlu0 %660
    %662 = vrot.lane.b32.xlu0 %v563, 64
    %v663 = vpop.permute.xlu0 %662
    %664 = vrot.lane.b32.xlu0 %v565, 64
    %v665 = vpop.permute.xlu0 %664
    %666 = vrot.lane.b32.xlu0 %v567, 64
    %v667 = vpop.permute.xlu0 %666
    %668 = vrot.lane.b32.xlu0 %v569, 64
    %v669 = vpop.permute.xlu0 %668
    %670 = vrot.lane.b32.xlu0 %v571, 64
    %v671 = vpop.permute.xlu0 %670
    %672 = vrot.lane.b32.xlu0 %v573, 64
    %v673 = vpop.permute.xlu0 %672
    %674 = vrot.lane.b32.xlu0 %v575, 64
    %v675 = vpop.permute.xlu0 %674
    %676 = vrot.lane.b32.xlu0 %v577, 64
    %v677 = vpop.permute.xlu0 %676
    %678 = vrot.lane.b32.xlu0 %v579, 64
    %v679 = vpop.permute.xlu0 %678
    %680 = vrot.lane.b32.xlu0 %v581, 64
    %v681 = vpop.permute.xlu0 %680
    %682 = vrot.lane.b32.xlu0 %v583, 64
    %v683 = vpop.permute.xlu0 %682
    %vm684 = vcmp.lt.s32.totalorder %v482, 64
    %v685 = vsel %vm684, %v585, %v635
    %v686 = vsel %vm684, %v587, %v637
    %v687 = vsel %vm684, %v589, %v639
    %v688 = vsel %vm684, %v591, %v641
    %v689 = vsel %vm684, %v593, %v643
    %v690 = vsel %vm684, %v595, %v645
    %v691 = vsel %vm684, %v597, %v647
    %v692 = vsel %vm684, %v599, %v649
    %v693 = vsel %vm684, %v601, %v651
    %v694 = vsel %vm684, %v603, %v653
    %v695 = vsel %vm684, %v605, %v655
    %v696 = vsel %vm684, %v607, %v657
    %v697 = vsel %vm684, %v609, %v659
    %v698 = vsel %vm684, %v611, %v661
    %v699 = vsel %vm684, %v613, %v663
    %v700 = vsel %vm684, %v615, %v665
    %v701 = vsel %vm684, %v617, %v667
    %v702 = vsel %vm684, %v619, %v669
    %v703 = vsel %vm684, %v621, %v671
    %v704 = vsel %vm684, %v623, %v673
    %v705 = vsel %vm684, %v625, %v675
    %v706 = vsel %vm684, %v627, %v677
    %v707 = vsel %vm684, %v629, %v679
    %v708 = vsel %vm684, %v631, %v681
    %v709 = vsel %vm684, %v633, %v683
    %v710 = vsel %vm684, %v635, %v585
    %v711 = vsel %vm684, %v637, %v587
    %v712 = vsel %vm684, %v639, %v589
    %v713 = vsel %vm684, %v641, %v591
    %v714 = vsel %vm684, %v643, %v593
    %v715 = vsel %vm684, %v645, %v595
    %v716 = vsel %vm684, %v647, %v597
    %v717 = vsel %vm684, %v649, %v599
    %v718 = vsel %vm684, %v651, %v601
    %v719 = vsel %vm684, %v653, %v603
    %v720 = vsel %vm684, %v655, %v605
    %v721 = vsel %vm684, %v657, %v607
    %v722 = vsel %vm684, %v659, %v609
    %v723 = vsel %vm684, %v661, %v611
    %v724 = vsel %vm684, %v663, %v613
    %v725 = vsel %vm684, %v665, %v615
    %v726 = vsel %vm684, %v667, %v617
    %v727 = vsel %vm684, %v669, %v619
    %v728 = vsel %vm684, %v671, %v621
    %v729 = vsel %vm684, %v673, %v623
    %v730 = vsel %vm684, %v675, %v625
    %v731 = vsel %vm684, %v677, %v627
    %v732 = vsel %vm684, %v679, %v629
    %v733 = vsel %vm684, %v681, %v631
    %v734 = vsel %vm684, %v683, %v633
    %v735 = vmax.f32 %v534, %v710
    %v736 = vmax.f32 %v535, %v685
    %v737 = vmax.f32 %v536, %v711
    %v738 = vmax.f32 %v537, %v686
    %v739 = vmax.f32 %v538, %v712
    %v740 = vmax.f32 %v539, %v687
    %v741 = vmax.f32 %v540, %v713
    %v742 = vmax.f32 %v541, %v688
    %v743 = vmax.f32 %v542, %v714
    %v744 = vmax.f32 %v543, %v689
    %v745 = vmax.f32 %v544, %v715
    %v746 = vmax.f32 %v545, %v690
    %v747 = vmax.f32 %v546, %v716
    %v748 = vmax.f32 %v547, %v691
    %v749 = vmax.f32 %v548, %v717
    %v750 = vmax.f32 %v549, %v692
    %v751 = vmax.f32 %v550, %v718
    %v752 = vmax.f32 %v551, %v693
    %v753 = vmax.f32 %v552, %v719
    %v754 = vmax.f32 %v553, %v694
    %v755 = vmax.f32 %v554, %v720
    %v756 = vmax.f32 %v555, %v695
    %v757 = vmax.f32 %v556, %v721
    %v758 = vmax.f32 %v557, %v696
    %v759 = vmax.f32 %v558, %v722
    %v760 = vmax.f32 %v559, %v697
    %v761 = vmax.f32 %v560, %v723
    %v762 = vmax.f32 %v561, %v698
    %v763 = vmax.f32 %v562, %v724
    %v764 = vmax.f32 %v563, %v699
    %v765 = vmax.f32 %v564, %v725
    %v766 = vmax.f32 %v565, %v700
    %v767 = vmax.f32 %v566, %v726
    %v768 = vmax.f32 %v567, %v701
    %v769 = vmax.f32 %v568, %v727
    %v770 = vmax.f32 %v569, %v702
    %v771 = vmax.f32 %v570, %v728
    %v772 = vmax.f32 %v571, %v703
    %v773 = vmax.f32 %v572, %v729
    %v774 = vmax.f32 %v573, %v704
    %v775 = vmax.f32 %v574, %v730
    %v776 = vmax.f32 %v575, %v705
    %v777 = vmax.f32 %v576, %v731
    %v778 = vmax.f32 %v577, %v706
    %v779 = vmax.f32 %v578, %v732
    %v780 = vmax.f32 %v579, %v707
    %v781 = vmax.f32 %v580, %v733
    %v782 = vmax.f32 %v581, %v708
    %v783 = vmax.f32 %v582, %v734
    %v784 = vmax.f32 %v583, %v709
    %v785 = vmax.f32 %v735, %v736
    %v786 = vmax.f32 %v737, %v738
    %v787 = vmax.f32 %v739, %v740
    %v788 = vmax.f32 %v741, %v742
    %v789 = vmax.f32 %v743, %v744
    %v790 = vmax.f32 %v745, %v746
    %v791 = vmax.f32 %v747, %v748
    %v792 = vmax.f32 %v749, %v750
    %v793 = vmax.f32 %v751, %v752
    %v794 = vmax.f32 %v753, %v754
    %v795 = vmax.f32 %v755, %v756
    %v796 = vmax.f32 %v757, %v758
    %v797 = vmax.f32 %v759, %v760
    %v798 = vmax.f32 %v761, %v762
    %v799 = vmax.f32 %v763, %v764
    %v800 = vmax.f32 %v765, %v766
    %v801 = vmax.f32 %v767, %v768
    %v802 = vmax.f32 %v769, %v770
    %v803 = vmax.f32 %v771, %v772
    %v804 = vmax.f32 %v773, %v774
    %v805 = vmax.f32 %v775, %v776
    %v806 = vmax.f32 %v777, %v778
    %v807 = vmax.f32 %v779, %v780
    %v808 = vmax.f32 %v781, %v782
    %v809 = vmax.f32 %v783, %v784
    %v810 = vld [vmem:[%s5] sm:$0x3]
    %vm811 = vcmp.gt.f32.partialorder %v810, 0.5
    %v812 = vsel %vm811, 1, 0
    %v813 = vperm.slane %v812, 0
    %v814 = vperm.slane %v812, 1
    %vm815 = vcmp.eq.s32.totalorder %v813, 1
    %vm816 = vcmp.eq.s32.totalorder %v814, 1
    %v817 = vsel %vm815, %v331, %v785
    %v818 = vsel %vm816, %v332, %v785
    %v819 = vsel %vm815, %v333, %v786
    %v820 = vsel %vm816, %v334, %v786
    %v821 = vsel %vm815, %v335, %v787
    %v822 = vsel %vm816, %v336, %v787
    %v823 = vsel %vm815, %v337, %v788
    %v824 = vsel %vm816, %v338, %v788
    %v825 = vsel %vm815, %v339, %v789
    %v826 = vsel %vm816, %v340, %v789
    %v827 = vsel %vm815, %v341, %v790
    %v828 = vsel %vm816, %v342, %v790
    %v829 = vsel %vm815, %v343, %v791
    %v830 = vsel %vm816, %v344, %v791
    %v831 = vsel %vm815, %v345, %v792
    %v832 = vsel %vm816, %v346, %v792
    %v833 = vsel %vm815, %v347, %v793
    %v834 = vsel %vm816, %v348, %v793
    %v835 = vsel %vm815, %v349, %v794
    %v836 = vsel %vm816, %v350, %v794
    %v837 = vsel %vm815, %v351, %v795
    %v838 = vsel %vm816, %v352, %v795
    %v839 = vsel %vm815, %v353, %v796
    %v840 = vsel %vm816, %v354, %v796
    %v841 = vsel %vm815, %v355, %v797
    %v842 = vsel %vm816, %v356, %v797
    %v843 = vsel %vm815, %v357, %v798
    %v844 = vsel %vm816, %v358, %v798
    %v845 = vsel %vm815, %v359, %v799
    %v846 = vsel %vm816, %v360, %v799
    %v847 = vsel %vm815, %v361, %v800
    %v848 = vsel %vm816, %v362, %v800
    %v849 = vsel %vm815, %v363, %v801
    %v850 = vsel %vm816, %v364, %v801
    %v851 = vsel %vm815, %v365, %v802
    %v852 = vsel %vm816, %v366, %v802
    %v853 = vsel %vm815, %v367, %v803
    %v854 = vsel %vm816, %v368, %v803
    %v855 = vsel %vm815, %v369, %v804
    %v856 = vsel %vm816, %v370, %v804
    %v857 = vsel %vm815, %v371, %v805
    %v858 = vsel %vm816, %v372, %v805
    %v859 = vsel %vm815, %v373, %v806
    %v860 = vsel %vm816, %v374, %v806
    %v861 = vsel %vm815, %v375, %v807
    %v862 = vsel %vm816, %v376, %v807
    %v863 = vsel %vm815, %v377, %v808
    %v864 = vsel %vm816, %v378, %v808
    %v865 = vsel %vm815, %v379, %v809
    %v866 = vsel %vm816, %v380, %v809
    %v867 = vld [vmem:[%s1] sm:$0xff]
    %v868 = vld [vmem:[%s1 + $0x8] sm:$0xff]
    %v869 = vld [vmem:[%s1 + $0x10] sm:$0xff]
    %v870 = vld [vmem:[%s1 + $0x18] sm:$0xff]
    %v871 = vld [vmem:[%s1 + $0x20] sm:$0xff]
    %v872 = vld [vmem:[%s1 + $0x28] sm:$0xff]
    %v873 = vld [vmem:[%s1 + $0x30] sm:$0xff]
    %v874 = vld [vmem:[%s1 + $0x38] sm:$0xff]
    %v875 = vld [vmem:[%s1 + $0x40] sm:$0xff]
    %v876 = vld [vmem:[%s1 + $0x48] sm:$0xff]
    %v877 = vld [vmem:[%s1 + $0x50] sm:$0xff]
    %v878 = vld [vmem:[%s1 + $0x58] sm:$0xff]
    %v879 = vld [vmem:[%s1 + $0x60] sm:$0xff]
    %v880 = vld [vmem:[%s1 + $0x68] sm:$0xff]
    %v881 = vld [vmem:[%s1 + $0x70] sm:$0xff]
    %v882 = vld [vmem:[%s1 + $0x78] sm:$0xff]
    %v883 = vld [vmem:[%s1 + $0x80] sm:$0xff]
    %v884 = vld [vmem:[%s1 + $0x88] sm:$0xff]
    %v885 = vld [vmem:[%s1 + $0x90] sm:$0xff]
    %v886 = vld [vmem:[%s1 + $0x98] sm:$0xff]
    %v887 = vld [vmem:[%s1 + $0xa0] sm:$0xff]
    %v888 = vld [vmem:[%s1 + $0xa8] sm:$0xff]
    %v889 = vld [vmem:[%s1 + $0xb0] sm:$0xff]
    %v890 = vld [vmem:[%s1 + $0xb8] sm:$0xff]
    %v891 = vld [vmem:[%s1 + $0xc0] sm:$0xff]
    %v892 = vld [vmem:[%s4] sm:$0xff]
    %v893 = vld [vmem:[%s4 + $0x8] sm:$0xff]
    %vm894 = vcmask 64512
    %v896 = vsel %vm894, %v867, 0
    %v899 = vsel %vm894, %v868, 0
    %v902 = vsel %vm894, %v869, 0
    %v905 = vsel %vm894, %v870, 0
    %v908 = vsel %vm894, %v871, 0
    %v911 = vsel %vm894, %v872, 0
    %v914 = vsel %vm894, %v873, 0
    %v917 = vsel %vm894, %v874, 0
    %v920 = vsel %vm894, %v875, 0
    %v923 = vsel %vm894, %v876, 0
    %v926 = vsel %vm894, %v877, 0
    %v929 = vsel %vm894, %v878, 0
    %v932 = vsel %vm894, %v879, 0
    %v935 = vsel %vm894, %v880, 0
    %v938 = vsel %vm894, %v881, 0
    %v941 = vsel %vm894, %v882, 0
    %v944 = vsel %vm894, %v883, 0
    %v947 = vsel %vm894, %v884, 0
    %v950 = vsel %vm894, %v885, 0
    %v953 = vsel %vm894, %v886, 0
    %v956 = vsel %vm894, %v887, 0
    %v959 = vsel %vm894, %v888, 0
    %v962 = vsel %vm894, %v889, 0
    %v965 = vsel %vm894, %v890, 0
    %v968 = vsel %vm894, %v891, 0
    %970 = vmatpush.msra.mxu0 0.0
    %971 = vmatpush.msra.mxu0 0.0
    %972 = vmatpush.msra.mxu0 0.0
    %973 = vmatpush.msra.mxu0 0.0
    %974 = vmatpush.msra.mxu0 0.0
    %975 = vmatpush.msra.mxu0 0.0
    %976 = vmatpush.msra.mxu0 0.0
    %977 = vmatpush.msra.mxu0 0.0
    %978 = vmatpush.msra.mxu0 0.0
    %979 = vmatpush.msra.mxu0 0.0
    %980 = vmatpush.msra.mxu0 0.0
    %981 = vmatpush.msra.mxu0 0.0
    %982 = vmatpush.msra.mxu0 0.0
    %983 = vmatpush.msra.mxu0 0.0
    %984 = vmatpush.msra.mxu0 0.0
    %985 = vmatpush.msra.mxu0 %v892
    %986 = vmatmul.f32.gmra.mxu0 %v896
    %v987 = vpop.f32.mrf.mxu0
    %v988 = vadd.f32 0.0, %v987
    %989 = vmatmul.f32.gmra.mxu0 %v899
    %v990 = vpop.f32.mrf.mxu0
    %v991 = vadd.f32 0.0, %v990
    %992 = vmatmul.f32.gmra.mxu0 %v902
    %v993 = vpop.f32.mrf.mxu0
    %v994 = vadd.f32 0.0, %v993
    %995 = vmatmul.f32.gmra.mxu0 %v905
    %v996 = vpop.f32.mrf.mxu0
    %v997 = vadd.f32 0.0, %v996
    %998 = vmatmul.f32.gmra.mxu0 %v908
    %v999 = vpop.f32.mrf.mxu0
    %v1000 = vadd.f32 0.0, %v999
    %1001 = vmatmul.f32.gmra.mxu0 %v911
    %v1002 = vpop.f32.mrf.mxu0
    %v1003 = vadd.f32 0.0, %v1002
    %1004 = vmatmul.f32.gmra.mxu0 %v914
    %v1005 = vpop.f32.mrf.mxu0
    %v1006 = vadd.f32 0.0, %v1005
    %1007 = vmatmul.f32.gmra.mxu0 %v917
    %v1008 = vpop.f32.mrf.mxu0
    %v1009 = vadd.f32 0.0, %v1008
    %1010 = vmatmul.f32.gmra.mxu0 %v920
    %v1011 = vpop.f32.mrf.mxu0
    %v1012 = vadd.f32 0.0, %v1011
    %1013 = vmatmul.f32.gmra.mxu0 %v923
    %v1014 = vpop.f32.mrf.mxu0
    %v1015 = vadd.f32 0.0, %v1014
    %1016 = vmatmul.f32.gmra.mxu0 %v926
    %v1017 = vpop.f32.mrf.mxu0
    %v1018 = vadd.f32 0.0, %v1017
    %1019 = vmatmul.f32.gmra.mxu0 %v929
    %v1020 = vpop.f32.mrf.mxu0
    %v1021 = vadd.f32 0.0, %v1020
    %1022 = vmatmul.f32.gmra.mxu0 %v932
    %v1023 = vpop.f32.mrf.mxu0
    %v1024 = vadd.f32 0.0, %v1023
    %1025 = vmatmul.f32.gmra.mxu0 %v935
    %v1026 = vpop.f32.mrf.mxu0
    %v1027 = vadd.f32 0.0, %v1026
    %1028 = vmatmul.f32.gmra.mxu0 %v938
    %v1029 = vpop.f32.mrf.mxu0
    %v1030 = vadd.f32 0.0, %v1029
    %1031 = vmatmul.f32.gmra.mxu0 %v941
    %v1032 = vpop.f32.mrf.mxu0
    %v1033 = vadd.f32 0.0, %v1032
    %1034 = vmatmul.f32.gmra.mxu0 %v944
    %v1035 = vpop.f32.mrf.mxu0
    %v1036 = vadd.f32 0.0, %v1035
    %1037 = vmatmul.f32.gmra.mxu0 %v947
    %v1038 = vpop.f32.mrf.mxu0
    %v1039 = vadd.f32 0.0, %v1038
    %1040 = vmatmul.f32.gmra.mxu0 %v950
    %v1041 = vpop.f32.mrf.mxu0
    %v1042 = vadd.f32 0.0, %v1041
    %1043 = vmatmul.f32.gmra.mxu0 %v953
    %v1044 = vpop.f32.mrf.mxu0
    %v1045 = vadd.f32 0.0, %v1044
    %1046 = vmatmul.f32.gmra.mxu0 %v956
    %v1047 = vpop.f32.mrf.mxu0
    %v1048 = vadd.f32 0.0, %v1047
    %1049 = vmatmul.f32.gmra.mxu0 %v959
    %v1050 = vpop.f32.mrf.mxu0
    %v1051 = vadd.f32 0.0, %v1050
    %1052 = vmatmul.f32.gmra.mxu0 %v962
    %v1053 = vpop.f32.mrf.mxu0
    %v1054 = vadd.f32 0.0, %v1053
    %1055 = vmatmul.f32.gmra.mxu0 %v965
    %v1056 = vpop.f32.mrf.mxu0
    %v1057 = vadd.f32 0.0, %v1056
    %1058 = vmatmul.f32.gmra.mxu0 %v968
    %v1059 = vpop.f32.mrf.mxu0
    %v1060 = vadd.f32 0.0, %v1059
    %1061 = vdwg.mxu0
    %1062 = vmatpush.msra.mxu0 0.0
    %1063 = vmatpush.msra.mxu0 0.0
    %1064 = vmatpush.msra.mxu0 0.0
    %1065 = vmatpush.msra.mxu0 0.0
    %1066 = vmatpush.msra.mxu0 0.0
    %1067 = vmatpush.msra.mxu0 0.0
    %1068 = vmatpush.msra.mxu0 0.0
    %1069 = vmatpush.msra.mxu0 0.0
    %1070 = vmatpush.msra.mxu0 0.0
    %1071 = vmatpush.msra.mxu0 0.0
    %1072 = vmatpush.msra.mxu0 0.0
    %1073 = vmatpush.msra.mxu0 0.0
    %1074 = vmatpush.msra.mxu0 0.0
    %1075 = vmatpush.msra.mxu0 0.0
    %1076 = vmatpush.msra.mxu0 0.0
    %1077 = vmatpush.msra.mxu0 %v893
    %1078 = vmatmul.f32.gmra.mxu0 %v896
    %v1079 = vpop.f32.mrf.mxu0
    %v1080 = vadd.f32 0.0, %v1079
    %1081 = vmatmul.f32.gmra.mxu0 %v899
    %v1082 = vpop.f32.mrf.mxu0
    %v1083 = vadd.f32 0.0, %v1082
    %1084 = vmatmul.f32.gmra.mxu0 %v902
    %v1085 = vpop.f32.mrf.mxu0
    %v1086 = vadd.f32 0.0, %v1085
    %1087 = vmatmul.f32.gmra.mxu0 %v905
    %v1088 = vpop.f32.mrf.mxu0
    %v1089 = vadd.f32 0.0, %v1088
    %1090 = vmatmul.f32.gmra.mxu0 %v908
    %v1091 = vpop.f32.mrf.mxu0
    %v1092 = vadd.f32 0.0, %v1091
    %1093 = vmatmul.f32.gmra.mxu0 %v911
    %v1094 = vpop.f32.mrf.mxu0
    %v1095 = vadd.f32 0.0, %v1094
    %1096 = vmatmul.f32.gmra.mxu0 %v914
    %v1097 = vpop.f32.mrf.mxu0
    %v1098 = vadd.f32 0.0, %v1097
    %1099 = vmatmul.f32.gmra.mxu0 %v917
    %v1100 = vpop.f32.mrf.mxu0
    %v1101 = vadd.f32 0.0, %v1100
    %1102 = vmatmul.f32.gmra.mxu0 %v920
    %v1103 = vpop.f32.mrf.mxu0
    %v1104 = vadd.f32 0.0, %v1103
    %1105 = vmatmul.f32.gmra.mxu0 %v923
    %v1106 = vpop.f32.mrf.mxu0
    %v1107 = vadd.f32 0.0, %v1106
    %1108 = vmatmul.f32.gmra.mxu0 %v926
    %v1109 = vpop.f32.mrf.mxu0
    %v1110 = vadd.f32 0.0, %v1109
    %1111 = vmatmul.f32.gmra.mxu0 %v929
    %v1112 = vpop.f32.mrf.mxu0
    %v1113 = vadd.f32 0.0, %v1112
    %1114 = vmatmul.f32.gmra.mxu0 %v932
    %v1115 = vpop.f32.mrf.mxu0
    %v1116 = vadd.f32 0.0, %v1115
    %1117 = vmatmul.f32.gmra.mxu0 %v935
    %v1118 = vpop.f32.mrf.mxu0
    %v1119 = vadd.f32 0.0, %v1118
    %1120 = vmatmul.f32.gmra.mxu0 %v938
    %v1121 = vpop.f32.mrf.mxu0
    %v1122 = vadd.f32 0.0, %v1121
    %1123 = vmatmul.f32.gmra.mxu0 %v941
    %v1124 = vpop.f32.mrf.mxu0
    %v1125 = vadd.f32 0.0, %v1124
    %1126 = vmatmul.f32.gmra.mxu0 %v944
    %v1127 = vpop.f32.mrf.mxu0
    %v1128 = vadd.f32 0.0, %v1127
    %1129 = vmatmul.f32.gmra.mxu0 %v947
    %v1130 = vpop.f32.mrf.mxu0
    %v1131 = vadd.f32 0.0, %v1130
    %1132 = vmatmul.f32.gmra.mxu0 %v950
    %v1133 = vpop.f32.mrf.mxu0
    %v1134 = vadd.f32 0.0, %v1133
    %1135 = vmatmul.f32.gmra.mxu0 %v953
    %v1136 = vpop.f32.mrf.mxu0
    %v1137 = vadd.f32 0.0, %v1136
    %1138 = vmatmul.f32.gmra.mxu0 %v956
    %v1139 = vpop.f32.mrf.mxu0
    %v1140 = vadd.f32 0.0, %v1139
    %1141 = vmatmul.f32.gmra.mxu0 %v959
    %v1142 = vpop.f32.mrf.mxu0
    %v1143 = vadd.f32 0.0, %v1142
    %1144 = vmatmul.f32.gmra.mxu0 %v962
    %v1145 = vpop.f32.mrf.mxu0
    %v1146 = vadd.f32 0.0, %v1145
    %1147 = vmatmul.f32.gmra.mxu0 %v965
    %v1148 = vpop.f32.mrf.mxu0
    %v1149 = vadd.f32 0.0, %v1148
    %1150 = vmatmul.f32.gmra.mxu0 %v968
    %v1151 = vpop.f32.mrf.mxu0
    %v1152 = vadd.f32 0.0, %v1151
    %1153 = vdwg.mxu0
    %v1154 = vmul.f32 %v817, %v988
    %v1155 = vmul.f32 %v818, %v1080
    %v1156 = vmul.f32 %v819, %v991
    %v1157 = vmul.f32 %v820, %v1083
    %v1158 = vmul.f32 %v821, %v994
    %v1159 = vmul.f32 %v822, %v1086
    %v1160 = vmul.f32 %v823, %v997
    %v1161 = vmul.f32 %v824, %v1089
    %v1162 = vmul.f32 %v825, %v1000
    %v1163 = vmul.f32 %v826, %v1092
    %v1164 = vmul.f32 %v827, %v1003
    %v1165 = vmul.f32 %v828, %v1095
    %v1166 = vmul.f32 %v829, %v1006
    %v1167 = vmul.f32 %v830, %v1098
    %v1168 = vmul.f32 %v831, %v1009
    %v1169 = vmul.f32 %v832, %v1101
    %v1170 = vmul.f32 %v833, %v1012
    %v1171 = vmul.f32 %v834, %v1104
    %v1172 = vmul.f32 %v835, %v1015
    %v1173 = vmul.f32 %v836, %v1107
    %v1174 = vmul.f32 %v837, %v1018
    %v1175 = vmul.f32 %v838, %v1110
    %v1176 = vmul.f32 %v839, %v1021
    %v1177 = vmul.f32 %v840, %v1113
    %v1178 = vmul.f32 %v841, %v1024
    %v1179 = vmul.f32 %v842, %v1116
    %v1180 = vmul.f32 %v843, %v1027
    %v1181 = vmul.f32 %v844, %v1119
    %v1182 = vmul.f32 %v845, %v1030
    %v1183 = vmul.f32 %v846, %v1122
    %v1184 = vmul.f32 %v847, %v1033
    %v1185 = vmul.f32 %v848, %v1125
    %v1186 = vmul.f32 %v849, %v1036
    %v1187 = vmul.f32 %v850, %v1128
    %v1188 = vmul.f32 %v851, %v1039
    %v1189 = vmul.f32 %v852, %v1131
    %v1190 = vmul.f32 %v853, %v1042
    %v1191 = vmul.f32 %v854, %v1134
    %v1192 = vmul.f32 %v855, %v1045
    %v1193 = vmul.f32 %v856, %v1137
    %v1194 = vmul.f32 %v857, %v1048
    %v1195 = vmul.f32 %v858, %v1140
    %v1196 = vmul.f32 %v859, %v1051
    %v1197 = vmul.f32 %v860, %v1143
    %v1198 = vmul.f32 %v861, %v1054
    %v1199 = vmul.f32 %v862, %v1146
    %v1200 = vmul.f32 %v863, %v1057
    %v1201 = vmul.f32 %v864, %v1149
    %v1202 = vmul.f32 %v865, %v1060
    %v1203 = vmul.f32 %v866, %v1152
    %1204 = vst [vmem:[#allocation2] sm:$0xff] %v1154
    %1205 = vst [vmem:[#allocation2 + $0x8] sm:$0xff] %v1155
    %1206 = vst [vmem:[#allocation2 + $0x10] sm:$0xff] %v1156
    %1207 = vst [vmem:[#allocation2 + $0x18] sm:$0xff] %v1157
    %1208 = vst [vmem:[#allocation2 + $0x20] sm:$0xff] %v1158
    %1209 = vst [vmem:[#allocation2 + $0x28] sm:$0xff] %v1159
    %1210 = vst [vmem:[#allocation2 + $0x30] sm:$0xff] %v1160
    %1211 = vst [vmem:[#allocation2 + $0x38] sm:$0xff] %v1161
    %1212 = vst [vmem:[#allocation2 + $0x40] sm:$0xff] %v1162
    %1213 = vst [vmem:[#allocation2 + $0x48] sm:$0xff] %v1163
    %1214 = vst [vmem:[#allocation2 + $0x50] sm:$0xff] %v1164
    %1215 = vst [vmem:[#allocation2 + $0x58] sm:$0xff] %v1165
    %1216 = vst [vmem:[#allocation2 + $0x60] sm:$0xff] %v1166
    %1217 = vst [vmem:[#allocation2 + $0x68] sm:$0xff] %v1167
    %1218 = vst [vmem:[#allocation2 + $0x70] sm:$0xff] %v1168
    %1219 = vst [vmem:[#allocation2 + $0x78] sm:$0xff] %v1169
    %1220 = vst [vmem:[#allocation2 + $0x80] sm:$0xff] %v1170
    %1221 = vst [vmem:[#allocation2 + $0x88] sm:$0xff] %v1171
    %1222 = vst [vmem:[#allocation2 + $0x90] sm:$0xff] %v1172
    %1223 = vst [vmem:[#allocation2 + $0x98] sm:$0xff] %v1173
    %1224 = vst [vmem:[#allocation2 + $0xa0] sm:$0xff] %v1174
    %1225 = vst [vmem:[#allocation2 + $0xa8] sm:$0xff] %v1175
    %1226 = vst [vmem:[#allocation2 + $0xb0] sm:$0xff] %v1176
    %1227 = vst [vmem:[#allocation2 + $0xb8] sm:$0xff] %v1177
    %1228 = vst [vmem:[#allocation2 + $0xc0] sm:$0xff] %v1178
    %1229 = vst [vmem:[#allocation2 + $0xc8] sm:$0xff] %v1179
    %1230 = vst [vmem:[#allocation2 + $0xd0] sm:$0xff] %v1180
    %1231 = vst [vmem:[#allocation2 + $0xd8] sm:$0xff] %v1181
    %1232 = vst [vmem:[#allocation2 + $0xe0] sm:$0xff] %v1182
    %1233 = vst [vmem:[#allocation2 + $0xe8] sm:$0xff] %v1183
    %1234 = vst [vmem:[#allocation2 + $0xf0] sm:$0xff] %v1184
    %1235 = vst [vmem:[#allocation2 + $0xf8] sm:$0xff] %v1185
    %1236 = vst [vmem:[#allocation2 + $0x100] sm:$0xff] %v1186
    %1237 = vst [vmem:[#allocation2 + $0x108] sm:$0xff] %v1187
    %1238 = vst [vmem:[#allocation2 + $0x110] sm:$0xff] %v1188
    %1239 = vst [vmem:[#allocation2 + $0x118] sm:$0xff] %v1189
    %1240 = vst [vmem:[#allocation2 + $0x120] sm:$0xff] %v1190
    %1241 = vst [vmem:[#allocation2 + $0x128] sm:$0xff] %v1191
    %1242 = vst [vmem:[#allocation2 + $0x130] sm:$0xff] %v1192
    %1243 = vst [vmem:[#allocation2 + $0x138] sm:$0xff] %v1193
    %1244 = vst [vmem:[#allocation2 + $0x140] sm:$0xff] %v1194
    %1245 = vst [vmem:[#allocation2 + $0x148] sm:$0xff] %v1195
    %1246 = vst [vmem:[#allocation2 + $0x150] sm:$0xff] %v1196
    %1247 = vst [vmem:[#allocation2 + $0x158] sm:$0xff] %v1197
    %1248 = vst [vmem:[#allocation2 + $0x160] sm:$0xff] %v1198
    %1249 = vst [vmem:[#allocation2 + $0x168] sm:$0xff] %v1199
    %1250 = vst [vmem:[#allocation2 + $0x170] sm:$0xff] %v1200
    %1251 = vst [vmem:[#allocation2 + $0x178] sm:$0xff] %v1201
    %1252 = vst [vmem:[#allocation2 + $0x180] sm:$0xff] %v1202
    %1253 = vst [vmem:[#allocation2 + $0x188] sm:$0xff] %v1203
    // Predicated region
    $region26: #{tpu_custom_call.1} parent=1 // pred_check
      _
    $region27: #{tpu_custom_call.1} parent=1 // pred_check_branch
      %1255 = sbr.rel (0) target = $region29
    $region28: #{tpu_custom_call.1} parent=1 // pred_region
      %1257 = vsyncadd [#allocation3], 0
      %s1258 = sshll.u32 [#allocation2], 4
      %s1259 = int_to_ptr.vmem [resolvable:$true] %s1258
      %s1260 = sshll.u32 %s6, 4
      %s1261 = int_to_ptr.hbm [resolvable:$true] %s1260
      %1266 = dma.vmem_to_hbm [thread:$0]  %s1259, 6400, %s1261, [#allocation3], 256, 256, 16
    $region29: #{tpu_custom_call.1} parent=1 // pred_fallthru
      _
    // Predicated region
    $region30: #{tpu_custom_call.1} parent=1 // pred_check
      _
    $region31: #{tpu_custom_call.1} parent=1 // pred_check_branch
      %1268 = sbr.rel (0) target = $region33
    $region32: #{tpu_custom_call.1} parent=1 // pred_region
      %1270 = dma.done [#allocation3], 6400
    $region33: #{tpu_custom_call.1} parent=1 // pred_fallthru
      _
    %1271 = vsyncpa [#allocation3], 1

</llo_original>
